<compile_context>
chip_gen: v5e
topology: v5e:2x2
jax: 0.10.0
libtpu: 0.0.40
codegen_flags: <defaults>
</compile_context>

<pallas_src>
import jax
import jax.numpy as jnp
from jax.experimental import pallas as pl
from jax.experimental.pallas import tpu as pltpu

LATENT = 64
HIDDEN = 256
IMAGE = 784


def _gen_mlp_kernel(x_ref, w1_ref, b1_ref, w2_ref, b2_ref, w3_ref, b3_ref, o_ref):
    # Layer 1: cast x to bf16 in-kernel (f32 read from HBM, no wrapper cast pass).
    x = x_ref[...].astype(jnp.bfloat16)
    h1 = jnp.dot(x, w1_ref[...], preferred_element_type=jnp.float32)
    h1 = jnp.maximum(h1 + b1_ref[...], 0.0)
    # Layer 2
    h2 = jnp.dot(h1.astype(jnp.bfloat16), w2_ref[...],
                 preferred_element_type=jnp.float32)
    h2 = jnp.maximum(h2 + b2_ref[...], 0.0)
    # Layer 3: bias + tanh in f32, store straight to the (tile_b, 784) output.
    h3 = jnp.dot(h2.astype(jnp.bfloat16), w3_ref[...],
                 preferred_element_type=jnp.float32)
    o_ref[...] = jnp.tanh(h3 + b3_ref[...]).astype(o_ref.dtype)


def _round_up(n, m):
    return ((n + m - 1) // m) * m


def _pick_tile_b(B):
    """Batch tile: never a giant single block; always pipelines for large B."""
    if B <= 256:
        # Small batch: one block, rounded to the 8-row sublane granule.
        return _round_up(max(B, 1), 8)
    # Large batch: fixed tile.  256 rows -> (256,784) f32 output tile ~0.8 MiB
    # (double-buffered ~1.6 MiB), guarantees >= 2 grid steps for B > 256
    # (pipelining + v7x megacore); use 512 only when there are many steps.
    return 512 if B >= 2048 else 256


def prepare_params(params):
    """One-time conversion of f32 nn.Linear-style params to kernel operands.

    Do this once outside the hot path: weights go to bf16 (MXU-native),
    biases stay f32 as (1, out) rows added to the f32 accumulators.
    """
    def prep(w, b):
        return w.astype(jnp.bfloat16), b.reshape(1, -1).astype(jnp.float32)

    w1, b1 = prep(params["w1"], params["b1"])
    w2, b2 = prep(params["w2"], params["b2"])
    w3, b3 = prep(params["w3"], params["b3"])
    return {"w1": w1, "b1": b1, "w2": w2, "b2": b2, "w3": w3, "b3": b3}


def generator_forward(x, prepared, *, tile_b=None, out_dtype=jnp.float32):
    """Pallas TPU forward for G.  x: (B, LATENT) f32 -> (B, IMAGE) out_dtype."""
    B = x.shape[0]
    if tile_b is None:
        tile_b = _pick_tile_b(B)
    tile_b = max(8, _round_up(tile_b, 8))

    grid_b = pl.cdiv(B, tile_b)
    pad_b = grid_b * tile_b - B
    if pad_b:
        # Pad the (cheap) input so all reads are in-bounds; the partial final
        # OUTPUT block is masked by Pallas (no wrapper slice over the output).
        x = jnp.pad(x, ((0, pad_b), (0, 0)))

    def rep(shape):
        # Grid-invariant (replicated) block for weights / biases.
        return pl.BlockSpec(shape, lambda i: (0, 0))

    out = pl.pallas_call(
        _gen_mlp_kernel,
        out_shape=jax.ShapeDtypeStruct((B, IMAGE), out_dtype),
        grid_spec=pltpu.PrefetchScalarGridSpec(
            num_scalar_prefetch=0,
            grid=(grid_b,),
            in_specs=[
                pl.BlockSpec((tile_b, LATENT), lambda i: (i, 0)),  # x tile
                rep((LATENT, HIDDEN)),                              # w1
                rep((1, HIDDEN)),                                   # b1
                rep((HIDDEN, HIDDEN)),                              # w2
                rep((1, HIDDEN)),                                   # b2
                rep((HIDDEN, IMAGE)),                               # w3
                rep((1, IMAGE)),                                    # b3
            ],
            out_specs=pl.BlockSpec((tile_b, IMAGE), lambda i: (i, 0)),
        ),
        compiler_params=pltpu.CompilerParams(
            dimension_semantics=("parallel",),  # batch axis -> megacore sharding
        ),
    )(x, prepared["w1"], prepared["b1"], prepared["w2"], prepared["b2"],
      prepared["w3"], prepared["b3"])

    return out


def init_params(key):
    """Deterministic init matching nn.Linear shapes (stored as (in, out) + (1, out))."""
    ks = jax.random.split(key, 6)

    def linear(kw, kb, fan_in, fan_out):
        bound = 1.0 / jnp.sqrt(fan_in)
        w = jax.random.uniform(kw, (fan_in, fan_out), jnp.float32, -bound, bound)
        b = jax.random.uniform(kb, (1, fan_out), jnp.float32, -bound, bound)
        return w, b

    w1, b1 = linear(ks[0], ks[1], LATENT, HIDDEN)
    w2, b2 = linear(ks[2], ks[3], HIDDEN, HIDDEN)
    w3, b3 = linear(ks[4], ks[5], HIDDEN, IMAGE)
    return {"w1": w1, "b1": b1, "w2": w2, "b2": b2, "w3": w3, "b3": b3}


def reference_forward(x, params):
    # Full-f32 reference (matches the PyTorch module's math).
    h1 = jnp.maximum(x @ params["w1"] + params["b1"], 0.0)
    h2 = jnp.maximum(h1 @ params["w2"] + params["b2"], 0.0)
    return jnp.tanh(h2 @ params["w3"] + params["b3"])


if __name__ == "__main__":
    key = jax.random.PRNGKey(0)
    kp, kx1, kx2 = jax.random.split(key, 3)
    params = init_params(kp)
    prepared = prepare_params(params)   # one-time bf16 weight prep

    # Case 1: small batch, single block.
    B1 = 16
    x1 = jax.random.normal(kx1, (B1, LATENT), jnp.float32)
    out1 = jax.block_until_ready(generator_forward(x1, prepared))
    ref1 = reference_forward(x1, params)
    assert out1.shape == (B1, IMAGE)
    # bf16 matmul inputs -> looser tolerance than full-f32 (outputs in [-1, 1]).
    assert jnp.allclose(out1, ref1, atol=5e-2, rtol=0), "mismatch vs reference (B=16)"

    # Case 2: batch not divisible by the tile -> cdiv grid + masked partial block.
    B2 = 20
    x2 = jax.random.normal(kx2, (B2, LATENT), jnp.float32)
    out2 = jax.block_until_ready(generator_forward(x2, prepared, tile_b=8))
    ref2 = reference_forward(x2, params)
    assert out2.shape == (B2, IMAGE)
    assert jnp.allclose(out2, ref2, atol=5e-2, rtol=0), "mismatch vs reference (B=20)"

    print("KERNEL_OK")
</pallas_src>

<mosaic_0001>
module attributes {stable_mosaic.version = 11 : i64} {
  func.func @_gen_mlp_kernel(%arg0: i32, %arg1: memref<16x64xf32, #tpu.memory_space<vmem>>, %arg2: memref<64x256xbf16, #tpu.memory_space<vmem>>, %arg3: memref<1x256xf32, #tpu.memory_space<vmem>>, %arg4: memref<256x256xbf16, #tpu.memory_space<vmem>>, %arg5: memref<1x256xf32, #tpu.memory_space<vmem>>, %arg6: memref<256x784xbf16, #tpu.memory_space<vmem>>, %arg7: memref<1x784xf32, #tpu.memory_space<vmem>>, %arg8: memref<16x784xf32, #tpu.memory_space<vmem>>) attributes {dimension_semantics = [#tpu.dimension_semantics<parallel>], iteration_bounds = array<i64: 1>, scalar_prefetch = 0 : i64, scratch_operands = 0 : i64, tpu.core_type = #tpu.core_type<tc>, window_params = [{transform_indices = @transform_0, window_bounds = array<i64: 16, 64>}, {pipeline_mode = #tpu.pipeline_mode<synchronous>, transform_indices = @transform_1, window_bounds = array<i64: 64, 256>}, {pipeline_mode = #tpu.pipeline_mode<synchronous>, transform_indices = @transform_2, window_bounds = array<i64: 1, 256>}, {pipeline_mode = #tpu.pipeline_mode<synchronous>, transform_indices = @transform_3, window_bounds = array<i64: 256, 256>}, {pipeline_mode = #tpu.pipeline_mode<synchronous>, transform_indices = @transform_4, window_bounds = array<i64: 1, 256>}, {pipeline_mode = #tpu.pipeline_mode<synchronous>, transform_indices = @transform_5, window_bounds = array<i64: 256, 784>}, {pipeline_mode = #tpu.pipeline_mode<synchronous>, transform_indices = @transform_6, window_bounds = array<i64: 1, 784>}, {transform_indices = @transform_7, window_bounds = array<i64: 16, 784>}]} {
    %c0 = arith.constant 0 : index
    %c0_0 = arith.constant 0 : index
    %0 = vector.load %arg1[%c0, %c0_0] : memref<16x64xf32, #tpu.memory_space<vmem>>, vector<16x64xf32>
    %1 = arith.truncf %0 : vector<16x64xf32> to vector<16x64xbf16>
    %c0_1 = arith.constant 0 : index
    %c0_2 = arith.constant 0 : index
    %2 = vector.load %arg2[%c0_1, %c0_2] : memref<64x256xbf16, #tpu.memory_space<vmem>>, vector<64x256xbf16>
    %cst = arith.constant dense<0.000000e+00> : vector<16x256xf32>
    %3 = tpu.matmul %1, %2, %cst {dimension_numbers = #tpu.dot_dimension_numbers<[1], [0], [0], [1], [0, 0, 1, 1], [], []>} : vector<16x64xbf16>, vector<64x256xbf16>, vector<16x256xf32> -> vector<16x256xf32>
    %c0_3 = arith.constant 0 : index
    %c0_4 = arith.constant 0 : index
    %4 = vector.load %arg3[%c0_3, %c0_4] : memref<1x256xf32, #tpu.memory_space<vmem>>, vector<1x256xf32>
    %5 = vector.broadcast %4 : vector<1x256xf32> to vector<16x256xf32>
    %6 = arith.addf %3, %5 : vector<16x256xf32>
    %cst_5 = arith.constant 0.000000e+00 : f32
    %7 = vector.broadcast %cst_5 : f32 to vector<16x256xf32>
    %8 = arith.maximumf %6, %7 : vector<16x256xf32>
    %9 = arith.truncf %8 : vector<16x256xf32> to vector<16x256xbf16>
    %c0_6 = arith.constant 0 : index
    %c0_7 = arith.constant 0 : index
    %10 = vector.load %arg4[%c0_6, %c0_7] : memref<256x256xbf16, #tpu.memory_space<vmem>>, vector<256x256xbf16>
    %cst_8 = arith.constant dense<0.000000e+00> : vector<16x256xf32>
    %11 = tpu.matmul %9, %10, %cst_8 {dimension_numbers = #tpu.dot_dimension_numbers<[1], [0], [0], [1], [0, 0, 1, 1], [], []>} : vector<16x256xbf16>, vector<256x256xbf16>, vector<16x256xf32> -> vector<16x256xf32>
    %c0_9 = arith.constant 0 : index
    %c0_10 = arith.constant 0 : index
    %12 = vector.load %arg5[%c0_9, %c0_10] : memref<1x256xf32, #tpu.memory_space<vmem>>, vector<1x256xf32>
    %13 = vector.broadcast %12 : vector<1x256xf32> to vector<16x256xf32>
    %14 = arith.addf %11, %13 : vector<16x256xf32>
    %cst_11 = arith.constant 0.000000e+00 : f32
    %15 = vector.broadcast %cst_11 : f32 to vector<16x256xf32>
    %16 = arith.maximumf %14, %15 : vector<16x256xf32>
    %17 = arith.truncf %16 : vector<16x256xf32> to vector<16x256xbf16>
    %c0_12 = arith.constant 0 : index
    %c0_13 = arith.constant 0 : index
    %18 = vector.load %arg6[%c0_12, %c0_13] : memref<256x784xbf16, #tpu.memory_space<vmem>>, vector<256x784xbf16>
    %cst_14 = arith.constant dense<0.000000e+00> : vector<16x784xf32>
    %19 = tpu.matmul %17, %18, %cst_14 {dimension_numbers = #tpu.dot_dimension_numbers<[1], [0], [0], [1], [0, 0, 1, 1], [], []>} : vector<16x256xbf16>, vector<256x784xbf16>, vector<16x784xf32> -> vector<16x784xf32>
    %c0_15 = arith.constant 0 : index
    %c0_16 = arith.constant 0 : index
    %20 = vector.load %arg7[%c0_15, %c0_16] : memref<1x784xf32, #tpu.memory_space<vmem>>, vector<1x784xf32>
    %21 = vector.broadcast %20 : vector<1x784xf32> to vector<16x784xf32>
    %22 = arith.addf %19, %21 : vector<16x784xf32>
    %23 = math.tanh %22 : vector<16x784xf32>
    %c0_17 = arith.constant 0 : index
    %c0_18 = arith.constant 0 : index
    %24 = vector.load %arg8[%c0_17, %c0_18] : memref<16x784xf32, #tpu.memory_space<vmem>>, vector<16x784xf32>
    tpu.vector_store %arg8[%c0_17, %c0_18], %23 {strides = array<i32>} : memref<16x784xf32, #tpu.memory_space<vmem>>, vector<16x784xf32>,
    return
  }
  func.func @transform_0(%arg0: i32) -> (i32, i32) {
    %c0_i32 = arith.constant 0 : i32
    %c0_i32_0 = arith.constant 0 : i32
    return %arg0, %c0_i32 : i32, i32
  }
  func.func @transform_1(%arg0: i32) -> (i32, i32) {
    %c0_i32 = arith.constant 0 : i32
    %c0_i32_0 = arith.constant 0 : i32
    %c0_i32_1 = arith.constant 0 : i32
    return %c0_i32, %c0_i32_0 : i32, i32
  }
  func.func @transform_2(%arg0: i32) -> (i32, i32) {
    %c0_i32 = arith.constant 0 : i32
    %c0_i32_0 = arith.constant 0 : i32
    %c0_i32_1 = arith.constant 0 : i32
    return %c0_i32, %c0_i32_0 : i32, i32
  }
  func.func @transform_3(%arg0: i32) -> (i32, i32) {
    %c0_i32 = arith.constant 0 : i32
    %c0_i32_0 = arith.constant 0 : i32
    %c0_i32_1 = arith.constant 0 : i32
    return %c0_i32, %c0_i32_0 : i32, i32
  }
  func.func @transform_4(%arg0: i32) -> (i32, i32) {
    %c0_i32 = arith.constant 0 : i32
    %c0_i32_0 = arith.constant 0 : i32
    %c0_i32_1 = arith.constant 0 : i32
    return %c0_i32, %c0_i32_0 : i32, i32
  }
  func.func @transform_5(%arg0: i32) -> (i32, i32) {
    %c0_i32 = arith.constant 0 : i32
    %c0_i32_0 = arith.constant 0 : i32
    %c0_i32_1 = arith.constant 0 : i32
    return %c0_i32, %c0_i32_0 : i32, i32
  }
  func.func @transform_6(%arg0: i32) -> (i32, i32) {
    %c0_i32 = arith.constant 0 : i32
    %c0_i32_0 = arith.constant 0 : i32
    %c0_i32_1 = arith.constant 0 : i32
    return %c0_i32, %c0_i32_0 : i32, i32
  }
  func.func @transform_7(%arg0: i32) -> (i32, i32) {
    %c0_i32 = arith.constant 0 : i32
    %c0_i32_0 = arith.constant 0 : i32
    return %arg0, %c0_i32 : i32, i32
  }
}

</mosaic_0001>

<llo_original>
// kernel: tpu_custom_call.1
$region0: #{tpu_custom_call.1}
  #allocation0 [shape = 'u32[]', space=smem, size = 0x4, offset = 0x4, fixed_abs, tag = 'smem constant byte address 0x4 - core index']
  #allocation1 [shape = 'u32[72,128]{1,0:T(1,128)}', space=vmem, size = 0x9000, scoped, tag = 'internal scratch']
  %s0 = inlined_call_operand.vmem [shape: f32[16,64], index: 0, kind: input, shape index: {}]
  %s1 = inlined_call_operand.vmem [shape: bf16[64,256], index: 1, kind: input, shape index: {}]
  %s2 = inlined_call_operand.vmem [shape: f32[1,256], index: 2, kind: input, shape index: {}]
  %s3 = inlined_call_operand.vmem [shape: bf16[256,256], index: 3, kind: input, shape index: {}]
  %s4 = inlined_call_operand.vmem [shape: f32[1,256], index: 4, kind: input, shape index: {}]
  %s5 = inlined_call_operand.vmem [shape: bf16[256,784], index: 5, kind: input, shape index: {}]
  %s6 = inlined_call_operand.vmem [shape: f32[1,784], index: 6, kind: input, shape index: {}]
  %s7 = inlined_call_operand.hbm [shape: f32[16,784], index: 7, kind: output, shape index: {}]
  %s8 = sld [smem:[#allocation0]]
  $region38: #{tpu_custom_call.1} parent=0
    _
  %s10 = ssub.s32 1, %s8
  %s11 = scalar_select 0, %s10, %s8
  $region1: #{tpu_custom_call.1} parent=0
    #allocation2 [shape = 'u8[57344]{0}', space=vmem, size = 0xe000, scoped, tag = 'output window, operand 0, single buffered']
    #allocation3 [shape = 's32[1]{0}', space=sflag, size = 0x4, scoped, tag = 'scoped memory for tpu_custom_call.1']
    %12 = vsyncpa [#allocation3], 0
    // Predicated region
    $region2: #{tpu_custom_call.1} parent=1 // pred_check
      _
    $region3: #{tpu_custom_call.1} parent=1 // pred_check_branch
      %14 = sbr.rel (0) target = $region5
    $region4: #{tpu_custom_call.1} parent=1 // pred_region
      _
    $region5: #{tpu_custom_call.1} parent=1 // pred_fallthru
      _
    // Predicated region
    $region6: #{tpu_custom_call.1} parent=1 // pred_check
      _
    $region7: #{tpu_custom_call.1} parent=1 // pred_check_branch
      %16 = sbr.rel (0) target = $region9
    $region8: #{tpu_custom_call.1} parent=1 // pred_region
      _
    $region9: #{tpu_custom_call.1} parent=1 // pred_fallthru
      _
    // Predicated region
    $region10: #{tpu_custom_call.1} parent=1 // pred_check
      _
    $region11: #{tpu_custom_call.1} parent=1 // pred_check_branch
      %18 = sbr.rel (0) target = $region13
    $region12: #{tpu_custom_call.1} parent=1 // pred_region
      _
    $region13: #{tpu_custom_call.1} parent=1 // pred_fallthru
      _
    // Predicated region
    $region14: #{tpu_custom_call.1} parent=1 // pred_check
      _
    $region15: #{tpu_custom_call.1} parent=1 // pred_check_branch
      %20 = sbr.rel (0) target = $region17
    $region16: #{tpu_custom_call.1} parent=1 // pred_region
      _
    $region17: #{tpu_custom_call.1} parent=1 // pred_fallthru
      _
    // Predicated region
    $region18: #{tpu_custom_call.1} parent=1 // pred_check
      _
    $region19: #{tpu_custom_call.1} parent=1 // pred_check_branch
      %22 = sbr.rel (0) target = $region21
    $region20: #{tpu_custom_call.1} parent=1 // pred_region
      _
    $region21: #{tpu_custom_call.1} parent=1 // pred_fallthru
      _
    // Predicated region
    $region22: #{tpu_custom_call.1} parent=1 // pred_check
      _
    $region23: #{tpu_custom_call.1} parent=1 // pred_check_branch
      %24 = sbr.rel (0) target = $region25
    $region24: #{tpu_custom_call.1} parent=1 // pred_region
      _
    $region25: #{tpu_custom_call.1} parent=1 // pred_fallthru
      _
    // Predicated region
    $region26: #{tpu_custom_call.1} parent=1 // pred_check
      _
    $region27: #{tpu_custom_call.1} parent=1 // pred_check_branch
      %26 = sbr.rel (0) target = $region29
    $region28: #{tpu_custom_call.1} parent=1 // pred_region
      _
    $region29: #{tpu_custom_call.1} parent=1 // pred_fallthru
      _
    %v28 = vld [vmem:[%s0] sm:$0xff]
    %v29 = vld [vmem:[%s0 + $0x8] sm:$0xff]
    %v30 = vpack.c.bf16 %v29, %v28
    %v31 = vld [vmem:[%s1] sm:$0xff]
    %v32 = vld [vmem:[%s1 + $0x8] sm:$0xff]
    %v33 = vld [vmem:[%s1 + $0x10] sm:$0xff]
    %v34 = vld [vmem:[%s1 + $0x18] sm:$0xff]
    %v35 = vld [vmem:[%s1 + $0x20] sm:$0xff]
    %v36 = vld [vmem:[%s1 + $0x28] sm:$0xff]
    %v37 = vld [vmem:[%s1 + $0x30] sm:$0xff]
    %v38 = vld [vmem:[%s1 + $0x38] sm:$0xff]
    %v39 = vld [vmem:[%s2] sm:$0x3]
    %v41 = vperm.slane %v39, 0
    %v42 = vperm.slane %v39, 1
    %v53 = vunpack.c.l.b16 %v31
    %v54 = vunpack.c.h.b16 %v31
    %v55 = vunpack.c.l.b16 %v32
    %v56 = vunpack.c.h.b16 %v32
    %v57 = vunpack.c.l.b16 %v33
    %v58 = vunpack.c.h.b16 %v33
    %v59 = vunpack.c.l.b16 %v34
    %v60 = vunpack.c.h.b16 %v34
    %v61 = vunpack.c.l.b16 %v35
    %v62 = vunpack.c.h.b16 %v35
    %v63 = vunpack.c.l.b16 %v36
    %v64 = vunpack.c.h.b16 %v36
    %v65 = vunpack.c.l.b16 %v37
    %v66 = vunpack.c.h.b16 %v37
    %v67 = vunpack.c.l.b16 %v38
    %v68 = vunpack.c.h.b16 %v38
    %v69 = vpack.c.b16 %v55, %v53
    %v70 = vpack.c.b16 %v56, %v54
    %v71 = vpack.c.b16 %v59, %v57
    %v72 = vpack.c.b16 %v60, %v58
    %v73 = vpack.c.b16 %v63, %v61
    %v74 = vpack.c.b16 %v64, %v62
    %v75 = vpack.c.b16 %v67, %v65
    %v76 = vpack.c.b16 %v68, %v66
    %vm85 = vcmask 523264
    %v87 = vsel %vm85, %v30, 0
    %89 = vmatpush.bf16.msra.mxu0 0
    %90 = vmatpush.bf16.msra.mxu0 0
    %91 = vmatpush.bf16.msra.mxu0 0
    %92 = vmatpush.bf16.msra.mxu0 0
    %93 = vmatpush.bf16.msra.mxu0 %v75
    %94 = vmatpush.bf16.msra.mxu0 %v73
    %95 = vmatpush.bf16.msra.mxu0 %v71
    %96 = vmatpush.bf16.msra.mxu0 %v69
    %97 = vmatmul.bf16.gmra.mxu0 %v87
    %v98 = vpop.f32.mrf.mxu0
    %v99 = vadd.f32 %v41, %v98
    %v100 = vpop.f32.mrf.mxu0
    %v101 = vadd.f32 %v41, %v100
    %102 = vdwg.mxu0
    %103 = vmatpush.bf16.msra.mxu0 0
    %104 = vmatpush.bf16.msra.mxu0 0
    %105 = vmatpush.bf16.msra.mxu0 0
    %106 = vmatpush.bf16.msra.mxu0 0
    %107 = vmatpush.bf16.msra.mxu0 %v76
    %108 = vmatpush.bf16.msra.mxu0 %v74
    %109 = vmatpush.bf16.msra.mxu0 %v72
    %110 = vmatpush.bf16.msra.mxu0 %v70
    %111 = vmatmul.bf16.gmra.mxu0 %v87
    %v112 = vpop.f32.mrf.mxu0
    %v113 = vadd.f32 %v42, %v112
    %v114 = vpop.f32.mrf.mxu0
    %v115 = vadd.f32 %v42, %v114
    %116 = vdwg.mxu0
    %v117 = vmax.f32 %v99, 0.0
    %v118 = vmax.f32 %v113, 0.0
    %v119 = vmax.f32 %v101, 0.0
    %v120 = vmax.f32 %v115, 0.0
    %v121 = vpack.c.bf16 %v119, %v117
    %v122 = vpack.c.bf16 %v120, %v118
    %v123 = vld [vmem:[%s3] sm:$0xff]
    %v124 = vld [vmem:[%s3 + $0x8] sm:$0xff]
    %v125 = vld [vmem:[%s3 + $0x10] sm:$0xff]
    %v126 = vld [vmem:[%s3 + $0x18] sm:$0xff]
    %v127 = vld [vmem:[%s3 + $0x20] sm:$0xff]
    %v128 = vld [vmem:[%s3 + $0x28] sm:$0xff]
    %v129 = vld [vmem:[%s3 + $0x30] sm:$0xff]
    %v130 = vld [vmem:[%s3 + $0x38] sm:$0xff]
    %v131 = vld [vmem:[%s3 + $0x40] sm:$0xff]
    %v132 = vld [vmem:[%s3 + $0x48] sm:$0xff]
    %v133 = vld [vmem:[%s3 + $0x50] sm:$0xff]
    %v134 = vld [vmem:[%s3 + $0x58] sm:$0xff]
    %v135 = vld [vmem:[%s3 + $0x60] sm:$0xff]
    %v136 = vld [vmem:[%s3 + $0x68] sm:$0xff]
    %v137 = vld [vmem:[%s3 + $0x70] sm:$0xff]
    %v138 = vld [vmem:[%s3 + $0x78] sm:$0xff]
    %v139 = vld [vmem:[%s3 + $0x80] sm:$0xff]
    %v140 = vld [vmem:[%s3 + $0x88] sm:$0xff]
    %v141 = vld [vmem:[%s3 + $0x90] sm:$0xff]
    %v142 = vld [vmem:[%s3 + $0x98] sm:$0xff]
    %v143 = vld [vmem:[%s3 + $0xa0] sm:$0xff]
    %v144 = vld [vmem:[%s3 + $0xa8] sm:$0xff]
    %v145 = vld [vmem:[%s3 + $0xb0] sm:$0xff]
    %v146 = vld [vmem:[%s3 + $0xb8] sm:$0xff]
    %v147 = vld [vmem:[%s3 + $0xc0] sm:$0xff]
    %v148 = vld [vmem:[%s3 + $0xc8] sm:$0xff]
    %v149 = vld [vmem:[%s3 + $0xd0] sm:$0xff]
    %v150 = vld [vmem:[%s3 + $0xd8] sm:$0xff]
    %v151 = vld [vmem:[%s3 + $0xe0] sm:$0xff]
    %v152 = vld [vmem:[%s3 + $0xe8] sm:$0xff]
    %v153 = vld [vmem:[%s3 + $0xf0] sm:$0xff]
    %v154 = vld [vmem:[%s3 + $0xf8] sm:$0xff]
    %v155 = vld [vmem:[%s4] sm:$0x3]
    %v157 = vperm.slane %v155, 0
    %v158 = vperm.slane %v155, 1
    %v193 = vunpack.c.l.b16 %v123
    %v194 = vunpack.c.h.b16 %v123
    %v195 = vunpack.c.l.b16 %v124
    %v196 = vunpack.c.h.b16 %v124
    %v197 = vunpack.c.l.b16 %v125
    %v198 = vunpack.c.h.b16 %v125
    %v199 = vunpack.c.l.b16 %v126
    %v200 = vunpack.c.h.b16 %v126
    %v201 = vunpack.c.l.b16 %v127
    %v202 = vunpack.c.h.b16 %v127
    %v203 = vunpack.c.l.b16 %v128
    %v204 = vunpack.c.h.b16 %v128
    %v205 = vunpack.c.l.b16 %v129
    %v206 = vunpack.c.h.b16 %v129
    %v207 = vunpack.c.l.b16 %v130
    %v208 = vunpack.c.h.b16 %v130
    %v209 = vunpack.c.l.b16 %v131
    %v210 = vunpack.c.h.b16 %v131
    %v211 = vunpack.c.l.b16 %v132
    %v212 = vunpack.c.h.b16 %v132
    %v213 = vunpack.c.l.b16 %v133
    %v214 = vunpack.c.h.b16 %v133
    %v215 = vunpack.c.l.b16 %v134
    %v216 = vunpack.c.h.b16 %v134
    %v217 = vunpack.c.l.b16 %v135
    %v218 = vunpack.c.h.b16 %v135
    %v219 = vunpack.c.l.b16 %v136
    %v220 = vunpack.c.h.b16 %v136
    %v221 = vunpack.c.l.b16 %v137
    %v222 = vunpack.c.h.b16 %v137
    %v223 = vunpack.c.l.b16 %v138
    %v224 = vunpack.c.h.b16 %v138
    %v225 = vunpack.c.l.b16 %v139
    %v226 = vunpack.c.h.b16 %v139
    %v227 = vunpack.c.l.b16 %v140
    %v228 = vunpack.c.h.b16 %v140
    %v229 = vunpack.c.l.b16 %v141
    %v230 = vunpack.c.h.b16 %v141
    %v231 = vunpack.c.l.b16 %v142
    %v232 = vunpack.c.h.b16 %v142
    %v233 = vunpack.c.l.b16 %v143
    %v234 = vunpack.c.h.b16 %v143
    %v235 = vunpack.c.l.b16 %v144
    %v236 = vunpack.c.h.b16 %v144
    %v237 = vunpack.c.l.b16 %v145
    %v238 = vunpack.c.h.b16 %v145
    %v239 = vunpack.c.l.b16 %v146
    %v240 = vunpack.c.h.b16 %v146
    %v241 = vunpack.c.l.b16 %v147
    %v242 = vunpack.c.h.b16 %v147
    %v243 = vunpack.c.l.b16 %v148
    %v244 = vunpack.c.h.b16 %v148
    %v245 = vunpack.c.l.b16 %v149
    %v246 = vunpack.c.h.b16 %v149
    %v247 = vunpack.c.l.b16 %v150
    %v248 = vunpack.c.h.b16 %v150
    %v249 = vunpack.c.l.b16 %v151
    %v250 = vunpack.c.h.b16 %v151
    %v251 = vunpack.c.l.b16 %v152
    %v252 = vunpack.c.h.b16 %v152
    %v253 = vunpack.c.l.b16 %v153
    %v254 = vunpack.c.h.b16 %v153
    %v255 = vunpack.c.l.b16 %v154
    %v256 = vunpack.c.h.b16 %v154
    %v257 = vpack.c.b16 %v195, %v193
    %v258 = vpack.c.b16 %v196, %v194
    %v259 = vpack.c.b16 %v199, %v197
    %v260 = vpack.c.b16 %v200, %v198
    %v261 = vpack.c.b16 %v203, %v201
    %v262 = vpack.c.b16 %v204, %v202
    %v263 = vpack.c.b16 %v207, %v205
    %v264 = vpack.c.b16 %v208, %v206
    %v265 = vpack.c.b16 %v211, %v209
    %v266 = vpack.c.b16 %v212, %v210
    %v267 = vpack.c.b16 %v215, %v213
    %v268 = vpack.c.b16 %v216, %v214
    %v269 = vpack.c.b16 %v219, %v217
    %v270 = vpack.c.b16 %v220, %v218
    %v271 = vpack.c.b16 %v223, %v221
    %v272 = vpack.c.b16 %v224, %v222
    %v273 = vpack.c.b16 %v227, %v225
    %v274 = vpack.c.b16 %v228, %v226
    %v275 = vpack.c.b16 %v231, %v229
    %v276 = vpack.c.b16 %v232, %v230
    %v277 = vpack.c.b16 %v235, %v233
    %v278 = vpack.c.b16 %v236, %v234
    %v279 = vpack.c.b16 %v239, %v237
    %v280 = vpack.c.b16 %v240, %v238
    %v281 = vpack.c.b16 %v243, %v241
    %v282 = vpack.c.b16 %v244, %v242
    %v283 = vpack.c.b16 %v247, %v245
    %v284 = vpack.c.b16 %v248, %v246
    %v285 = vpack.c.b16 %v251, %v249
    %v286 = vpack.c.b16 %v252, %v250
    %v287 = vpack.c.b16 %v255, %v253
    %v288 = vpack.c.b16 %v256, %v254
    %321 = vmatpush.bf16.msra.mxu0 %v271
    %322 = vmatpush.bf16.msra.mxu0 %v269
    %323 = vmatpush.bf16.msra.mxu0 %v267
    %324 = vmatpush.bf16.msra.mxu0 %v265
    %325 = vmatpush.bf16.msra.mxu0 %v263
    %326 = vmatpush.bf16.msra.mxu0 %v261
    %327 = vmatpush.bf16.msra.mxu0 %v259
    %328 = vmatpush.bf16.msra.mxu0 %v257
    %329 = vmatmul.bf16.gmra.mxu0 %v121
    %v330 = vpop.f32.mrf.mxu0
    %v331 = vadd.f32 %v157, %v330
    %v332 = vpop.f32.mrf.mxu0
    %v333 = vadd.f32 %v157, %v332
    %334 = vdwg.mxu0
    %335 = vmatpush.bf16.msra.mxu0 %v287
    %336 = vmatpush.bf16.msra.mxu0 %v285
    %337 = vmatpush.bf16.msra.mxu0 %v283
    %338 = vmatpush.bf16.msra.mxu0 %v281
    %339 = vmatpush.bf16.msra.mxu0 %v279
    %340 = vmatpush.bf16.msra.mxu0 %v277
    %341 = vmatpush.bf16.msra.mxu0 %v275
    %342 = vmatpush.bf16.msra.mxu0 %v273
    %343 = vmatmul.bf16.gmra.mxu0 %v122
    %v344 = vpop.f32.mrf.mxu0
    %v345 = vadd.f32 %v331, %v344
    %v346 = vpop.f32.mrf.mxu0
    %v347 = vadd.f32 %v333, %v346
    %348 = vdwg.mxu0
    %349 = vmatpush.bf16.msra.mxu0 %v272
    %350 = vmatpush.bf16.msra.mxu0 %v270
    %351 = vmatpush.bf16.msra.mxu0 %v268
    %352 = vmatpush.bf16.msra.mxu0 %v266
    %353 = vmatpush.bf16.msra.mxu0 %v264
    %354 = vmatpush.bf16.msra.mxu0 %v262
    %355 = vmatpush.bf16.msra.mxu0 %v260
    %356 = vmatpush.bf16.msra.mxu0 %v258
    %357 = vmatmul.bf16.gmra.mxu0 %v121
    %v358 = vpop.f32.mrf.mxu0
    %v359 = vadd.f32 %v158, %v358
    %v360 = vpop.f32.mrf.mxu0
    %v361 = vadd.f32 %v158, %v360
    %362 = vdwg.mxu0
    %363 = vmatpush.bf16.msra.mxu0 %v288
    %364 = vmatpush.bf16.msra.mxu0 %v286
    %365 = vmatpush.bf16.msra.mxu0 %v284
    %366 = vmatpush.bf16.msra.mxu0 %v282
    %367 = vmatpush.bf16.msra.mxu0 %v280
    %368 = vmatpush.bf16.msra.mxu0 %v278
    %369 = vmatpush.bf16.msra.mxu0 %v276
    %370 = vmatpush.bf16.msra.mxu0 %v274
    %371 = vmatmul.bf16.gmra.mxu0 %v122
    %v372 = vpop.f32.mrf.mxu0
    %v373 = vadd.f32 %v359, %v372
    %v374 = vpop.f32.mrf.mxu0
    %v375 = vadd.f32 %v361, %v374
    %376 = vdwg.mxu0
    %v377 = vmax.f32 %v345, 0.0
    %v378 = vmax.f32 %v373, 0.0
    %v379 = vmax.f32 %v347, 0.0
    %v380 = vmax.f32 %v375, 0.0
    %v381 = vpack.c.bf16 %v379, %v377
    %v382 = vpack.c.bf16 %v380, %v378
    %v383 = vld [vmem:[%s5] sm:$0xff]
    %v384 = vld [vmem:[%s5 + $0x8] sm:$0xff]
    %v385 = vld [vmem:[%s5 + $0x10] sm:$0xff]
    %v386 = vld [vmem:[%s5 + $0x18] sm:$0xf]
    %v387 = vld [vmem:[%s5 + $0x1c] sm:$0xff]
    %v388 = vld [vmem:[%s5 + $0x24] sm:$0xff]
    %v389 = vld [vmem:[%s5 + $0x2c] sm:$0xff]
    %v390 = vld [vmem:[%s5 + $0x34] sm:$0xf]
    %v391 = vld [vmem:[%s5 + $0x38] sm:$0xff]
    %v392 = vld [vmem:[%s5 + $0x40] sm:$0xff]
    %v393 = vld [vmem:[%s5 + $0x48] sm:$0xff]
    %v394 = vld [vmem:[%s5 + $0x50] sm:$0xf]
    %v395 = vld [vmem:[%s5 + $0x54] sm:$0xff]
    %v396 = vld [vmem:[%s5 + $0x5c] sm:$0xff]
    %v397 = vld [vmem:[%s5 + $0x64] sm:$0xff]
    %v398 = vld [vmem:[%s5 + $0x6c] sm:$0xf]
    %v399 = vld [vmem:[%s5 + $0x70] sm:$0xff]
    %v400 = vld [vmem:[%s5 + $0x78] sm:$0xff]
    %v401 = vld [vmem:[%s5 + $0x80] sm:$0xff]
    %v402 = vld [vmem:[%s5 + $0x88] sm:$0xf]
    %v403 = vld [vmem:[%s5 + $0x8c] sm:$0xff]
    %v404 = vld [vmem:[%s5 + $0x94] sm:$0xff]
    %v405 = vld [vmem:[%s5 + $0x9c] sm:$0xff]
    %v406 = vld [vmem:[%s5 + $0xa4] sm:$0xf]
    %v407 = vld [vmem:[%s5 + $0xa8] sm:$0xff]
    %v408 = vld [vmem:[%s5 + $0xb0] sm:$0xff]
    %v409 = vld [vmem:[%s5 + $0xb8] sm:$0xff]
    %v410 = vld [vmem:[%s5 + $0xc0] sm:$0xf]
    %v411 = vld [vmem:[%s5 + $0xc4] sm:$0xff]
    %v412 = vld [vmem:[%s5 + $0xcc] sm:$0xff]
    %v413 = vld [vmem:[%s5 + $0xd4] sm:$0xff]
    %v414 = vld [vmem:[%s5 + $0xdc] sm:$0xf]
    %v415 = vld [vmem:[%s5 + $0xe0] sm:$0xff]
    %v416 = vld [vmem:[%s5 + $0xe8] sm:$0xff]
    %v417 = vld [vmem:[%s5 + $0xf0] sm:$0xff]
    %v418 = vld [vmem:[%s5 + $0xf8] sm:$0xf]
    %v419 = vld [vmem:[%s5 + $0xfc] sm:$0xff]
    %v420 = vld [vmem:[%s5 + $0x104] sm:$0xff]
    %v421 = vld [vmem:[%s5 + $0x10c] sm:$0xff]
    %v422 = vld [vmem:[%s5 + $0x114] sm:$0xf]
    %v423 = vld [vmem:[%s5 + $0x118] sm:$0xff]
    %v424 = vld [vmem:[%s5 + $0x120] sm:$0xff]
    %v425 = vld [vmem:[%s5 + $0x128] sm:$0xff]
    %v426 = vld [vmem:[%s5 + $0x130] sm:$0xf]
    %v427 = vld [vmem:[%s5 + $0x134] sm:$0xff]
    %v428 = vld [vmem:[%s5 + $0x13c] sm:$0xff]
    %v429 = vld [vmem:[%s5 + $0x144] sm:$0xff]
    %v430 = vld [vmem:[%s5 + $0x14c] sm:$0xf]
    %v431 = vld [vmem:[%s5 + $0x150] sm:$0xff]
    %v432 = vld [vmem:[%s5 + $0x158] sm:$0xff]
    %v433 = vld [vmem:[%s5 + $0x160] sm:$0xff]
    %v434 = vld [vmem:[%s5 + $0x168] sm:$0xf]
    %v435 = vld [vmem:[%s5 + $0x16c] sm:$0xff]
    %v436 = vld [vmem:[%s5 + $0x174] sm:$0xff]
    %v437 = vld [vmem:[%s5 + $0x17c] sm:$0xff]
    %v438 = vld [vmem:[%s5 + $0x184] sm:$0xf]
    %v439 = vld [vmem:[%s5 + $0x188] sm:$0xff]
    %v440 = vld [vmem:[%s5 + $0x190] sm:$0xff]
    %v441 = vld [vmem:[%s5 + $0x198] sm:$0xff]
    %v442 = vld [vmem:[%s5 + $0x1a0] sm:$0xf]
    %v443 = vld [vmem:[%s5 + $0x1a4] sm:$0xff]
    %v444 = vld [vmem:[%s5 + $0x1ac] sm:$0xff]
    %v445 = vld [vmem:[%s5 + $0x1b4] sm:$0xff]
    %v446 = vld [vmem:[%s5 + $0x1bc] sm:$0xf]
    %v447 = vld [vmem:[%s5 + $0x1c0] sm:$0xff]
    %v448 = vld [vmem:[%s5 + $0x1c8] sm:$0xff]
    %v449 = vld [vmem:[%s5 + $0x1d0] sm:$0xff]
    %v450 = vld [vmem:[%s5 + $0x1d8] sm:$0xf]
    %v451 = vld [vmem:[%s5 + $0x1dc] sm:$0xff]
    %v452 = vld [vmem:[%s5 + $0x1e4] sm:$0xff]
    %v453 = vld [vmem:[%s5 + $0x1ec] sm:$0xff]
    %v454 = vld [vmem:[%s5 + $0x1f4] sm:$0xf]
    %v455 = vld [vmem:[%s5 + $0x1f8] sm:$0xff]
    %v456 = vld [vmem:[%s5 + $0x200] sm:$0xff]
    %v457 = vld [vmem:[%s5 + $0x208] sm:$0xff]
    %v458 = vld [vmem:[%s5 + $0x210] sm:$0xf]
    %v459 = vld [vmem:[%s5 + $0x214] sm:$0xff]
    %v460 = vld [vmem:[%s5 + $0x21c] sm:$0xff]
    %v461 = vld [vmem:[%s5 + $0x224] sm:$0xff]
    %v462 = vld [vmem:[%s5 + $0x22c] sm:$0xf]
    %v463 = vld [vmem:[%s5 + $0x230] sm:$0xff]
    %v464 = vld [vmem:[%s5 + $0x238] sm:$0xff]
    %v465 = vld [vmem:[%s5 + $0x240] sm:$0xff]
    %v466 = vld [vmem:[%s5 + $0x248] sm:$0xf]
    %v467 = vld [vmem:[%s5 + $0x24c] sm:$0xff]
    %v468 = vld [vmem:[%s5 + $0x254] sm:$0xff]
    %v469 = vld [vmem:[%s5 + $0x25c] sm:$0xff]
    %v470 = vld [vmem:[%s5 + $0x264] sm:$0xf]
    %v471 = vld [vmem:[%s5 + $0x268] sm:$0xff]
    %v472 = vld [vmem:[%s5 + $0x270] sm:$0xff]
    %v473 = vld [vmem:[%s5 + $0x278] sm:$0xff]
    %v474 = vld [vmem:[%s5 + $0x280] sm:$0xf]
    %v475 = vld [vmem:[%s5 + $0x284] sm:$0xff]
    %v476 = vld [vmem:[%s5 + $0x28c] sm:$0xff]
    %v477 = vld [vmem:[%s5 + $0x294] sm:$0xff]
    %v478 = vld [vmem:[%s5 + $0x29c] sm:$0xf]
    %v479 = vld [vmem:[%s5 + $0x2a0] sm:$0xff]
    %v480 = vld [vmem:[%s5 + $0x2a8] sm:$0xff]
    %v481 = vld [vmem:[%s5 + $0x2b0] sm:$0xff]
    %v482 = vld [vmem:[%s5 + $0x2b8] sm:$0xf]
    %v483 = vld [vmem:[%s5 + $0x2bc] sm:$0xff]
    %v484 = vld [vmem:[%s5 + $0x2c4] sm:$0xff]
    %v485 = vld [vmem:[%s5 + $0x2cc] sm:$0xff]
    %v486 = vld [vmem:[%s5 + $0x2d4] sm:$0xf]
    %v487 = vld [vmem:[%s5 + $0x2d8] sm:$0xff]
    %v488 = vld [vmem:[%s5 + $0x2e0] sm:$0xff]
    %v489 = vld [vmem:[%s5 + $0x2e8] sm:$0xff]
    %v490 = vld [vmem:[%s5 + $0x2f0] sm:$0xf]
    %v491 = vld [vmem:[%s5 + $0x2f4] sm:$0xff]
    %v492 = vld [vmem:[%s5 + $0x2fc] sm:$0xff]
    %v493 = vld [vmem:[%s5 + $0x304] sm:$0xff]
    %v494 = vld [vmem:[%s5 + $0x30c] sm:$0xf]
    %v495 = vld [vmem:[%s5 + $0x310] sm:$0xff]
    %v496 = vld [vmem:[%s5 + $0x318] sm:$0xff]
    %v497 = vld [vmem:[%s5 + $0x320] sm:$0xff]
    %v498 = vld [vmem:[%s5 + $0x328] sm:$0xf]
    %v499 = vld [vmem:[%s5 + $0x32c] sm:$0xff]
    %v500 = vld [vmem:[%s5 + $0x334] sm:$0xff]
    %v501 = vld [vmem:[%s5 + $0x33c] sm:$0xff]
    %v502 = vld [vmem:[%s5 + $0x344] sm:$0xf]
    %v503 = vld [vmem:[%s5 + $0x348] sm:$0xff]
    %v504 = vld [vmem:[%s5 + $0x350] sm:$0xff]
    %v505 = vld [vmem:[%s5 + $0x358] sm:$0xff]
    %v506 = vld [vmem:[%s5 + $0x360] sm:$0xf]
    %v507 = vld [vmem:[%s5 + $0x364] sm:$0xff]
    %v508 = vld [vmem:[%s5 + $0x36c] sm:$0xff]
    %v509 = vld [vmem:[%s5 + $0x374] sm:$0xff]
    %v510 = vld [vmem:[%s5 + $0x37c] sm:$0xf]
    %v511 = vld [vmem:[%s6] sm:$0x7f]
    %v513 = vperm.slane %v511, 0
    %v514 = vperm.slane %v511, 1
    %v515 = vperm.slane %v511, 2
    %v516 = vperm.slane %v511, 3
    %v517 = vperm.slane %v511, 4
    %v518 = vperm.slane %v511, 5
    %v519 = vperm.slane %v511, 6
    %v655 = vunpack.c.l.b16 %v383
    %v656 = vunpack.c.h.b16 %v383
    %v657 = vunpack.c.l.b16 %v384
    %v658 = vunpack.c.h.b16 %v384
    %v659 = vunpack.c.l.b16 %v385
    %v660 = vunpack.c.h.b16 %v385
    %v661 = vunpack.c.l.b16 %v386
    %v662 = vunpack.c.l.b16 %v387
    %v663 = vunpack.c.h.b16 %v387
    %v664 = vunpack.c.l.b16 %v388
    %v665 = vunpack.c.h.b16 %v388
    %v666 = vunpack.c.l.b16 %v389
    %v667 = vunpack.c.h.b16 %v389
    %v668 = vunpack.c.l.b16 %v390
    %v669 = vunpack.c.l.b16 %v391
    %v670 = vunpack.c.h.b16 %v391
    %v671 = vunpack.c.l.b16 %v392
    %v672 = vunpack.c.h.b16 %v392
    %v673 = vunpack.c.l.b16 %v393
    %v674 = vunpack.c.h.b16 %v393
    %v675 = vunpack.c.l.b16 %v394
    %v676 = vunpack.c.l.b16 %v395
    %v677 = vunpack.c.h.b16 %v395
    %v678 = vunpack.c.l.b16 %v396
    %v679 = vunpack.c.h.b16 %v396
    %v680 = vunpack.c.l.b16 %v397
    %v681 = vunpack.c.h.b16 %v397
    %v682 = vunpack.c.l.b16 %v398
    %v683 = vunpack.c.l.b16 %v399
    %v684 = vunpack.c.h.b16 %v399
    %v685 = vunpack.c.l.b16 %v400
    %v686 = vunpack.c.h.b16 %v400
    %v687 = vunpack.c.l.b16 %v401
    %v688 = vunpack.c.h.b16 %v401
    %v689 = vunpack.c.l.b16 %v402
    %v690 = vunpack.c.l.b16 %v403
    %v691 = vunpack.c.h.b16 %v403
    %v692 = vunpack.c.l.b16 %v404
    %v693 = vunpack.c.h.b16 %v404
    %v694 = vunpack.c.l.b16 %v405
    %v695 = vunpack.c.h.b16 %v405
    %v696 = vunpack.c.l.b16 %v406
    %v697 = vunpack.c.l.b16 %v407
    %v698 = vunpack.c.h.b16 %v407
    %v699 = vunpack.c.l.b16 %v408
    %v700 = vunpack.c.h.b16 %v408
    %v701 = vunpack.c.l.b16 %v409
    %v702 = vunpack.c.h.b16 %v409
    %v703 = vunpack.c.l.b16 %v410
    %v704 = vunpack.c.l.b16 %v411
    %v705 = vunpack.c.h.b16 %v411
    %v706 = vunpack.c.l.b16 %v412
    %v707 = vunpack.c.h.b16 %v412
    %v708 = vunpack.c.l.b16 %v413
    %v709 = vunpack.c.h.b16 %v413
    %v710 = vunpack.c.l.b16 %v414
    %v711 = vunpack.c.l.b16 %v415
    %v712 = vunpack.c.h.b16 %v415
    %v713 = vunpack.c.l.b16 %v416
    %v714 = vunpack.c.h.b16 %v416
    %v715 = vunpack.c.l.b16 %v417
    %v716 = vunpack.c.h.b16 %v417
    %v717 = vunpack.c.l.b16 %v418
    %v718 = vunpack.c.l.b16 %v419
    %v719 = vunpack.c.h.b16 %v419
    %v720 = vunpack.c.l.b16 %v420
    %v721 = vunpack.c.h.b16 %v420
    %v722 = vunpack.c.l.b16 %v421
    %v723 = vunpack.c.h.b16 %v421
    %v724 = vunpack.c.l.b16 %v422
    %v725 = vunpack.c.l.b16 %v423
    %v726 = vunpack.c.h.b16 %v423
    %v727 = vunpack.c.l.b16 %v424
    %v728 = vunpack.c.h.b16 %v424
    %v729 = vunpack.c.l.b16 %v425
    %v730 = vunpack.c.h.b16 %v425
    %v731 = vunpack.c.l.b16 %v426
    %v732 = vunpack.c.l.b16 %v427
    %v733 = vunpack.c.h.b16 %v427
    %v734 = vunpack.c.l.b16 %v428
    %v735 = vunpack.c.h.b16 %v428
    %v736 = vunpack.c.l.b16 %v429
    %v737 = vunpack.c.h.b16 %v429
    %v738 = vunpack.c.l.b16 %v430
    %v739 = vunpack.c.l.b16 %v431
    %v740 = vunpack.c.h.b16 %v431
    %v741 = vunpack.c.l.b16 %v432
    %v742 = vunpack.c.h.b16 %v432
    %v743 = vunpack.c.l.b16 %v433
    %v744 = vunpack.c.h.b16 %v433
    %v745 = vunpack.c.l.b16 %v434
    %v746 = vunpack.c.l.b16 %v435
    %v747 = vunpack.c.h.b16 %v435
    %v748 = vunpack.c.l.b16 %v436
    %v749 = vunpack.c.h.b16 %v436
    %v750 = vunpack.c.l.b16 %v437
    %v751 = vunpack.c.h.b16 %v437
    %v752 = vunpack.c.l.b16 %v438
    %v753 = vunpack.c.l.b16 %v439
    %v754 = vunpack.c.h.b16 %v439
    %v755 = vunpack.c.l.b16 %v440
    %v756 = vunpack.c.h.b16 %v440
    %v757 = vunpack.c.l.b16 %v441
    %v758 = vunpack.c.h.b16 %v441
    %v759 = vunpack.c.l.b16 %v442
    %v760 = vunpack.c.l.b16 %v443
    %v761 = vunpack.c.h.b16 %v443
    %v762 = vunpack.c.l.b16 %v444
    %v763 = vunpack.c.h.b16 %v444
    %v764 = vunpack.c.l.b16 %v445
    %v765 = vunpack.c.h.b16 %v445
    %v766 = vunpack.c.l.b16 %v446
    %v767 = vunpack.c.l.b16 %v447
    %v768 = vunpack.c.h.b16 %v447
    %v769 = vunpack.c.l.b16 %v448
    %v770 = vunpack.c.h.b16 %v448
    %v771 = vunpack.c.l.b16 %v449
    %v772 = vunpack.c.h.b16 %v449
    %v773 = vunpack.c.l.b16 %v450
    %v774 = vunpack.c.l.b16 %v451
    %v775 = vunpack.c.h.b16 %v451
    %v776 = vunpack.c.l.b16 %v452
    %v777 = vunpack.c.h.b16 %v452
    %v778 = vunpack.c.l.b16 %v453
    %v779 = vunpack.c.h.b16 %v453
    %v780 = vunpack.c.l.b16 %v454
    %v781 = vunpack.c.l.b16 %v455
    %v782 = vunpack.c.h.b16 %v455
    %v783 = vunpack.c.l.b16 %v456
    %v784 = vunpack.c.h.b16 %v456
    %v785 = vunpack.c.l.b16 %v457
    %v786 = vunpack.c.h.b16 %v457
    %v787 = vunpack.c.l.b16 %v458
    %v788 = vunpack.c.l.b16 %v459
    %v789 = vunpack.c.h.b16 %v459
    %v790 = vunpack.c.l.b16 %v460
    %v791 = vunpack.c.h.b16 %v460
    %v792 = vunpack.c.l.b16 %v461
    %v793 = vunpack.c.h.b16 %v461
    %v794 = vunpack.c.l.b16 %v462
    %v795 = vunpack.c.l.b16 %v463
    %v796 = vunpack.c.h.b16 %v463
    %v797 = vunpack.c.l.b16 %v464
    %v798 = vunpack.c.h.b16 %v464
    %v799 = vunpack.c.l.b16 %v465
    %v800 = vunpack.c.h.b16 %v465
    %v801 = vunpack.c.l.b16 %v466
    %v802 = vunpack.c.l.b16 %v467
    %v803 = vunpack.c.h.b16 %v467
    %v804 = vunpack.c.l.b16 %v468
    %v805 = vunpack.c.h.b16 %v468
    %v806 = vunpack.c.l.b16 %v469
    %v807 = vunpack.c.h.b16 %v469
    %v808 = vunpack.c.l.b16 %v470
    %v809 = vunpack.c.l.b16 %v471
    %v810 = vunpack.c.h.b16 %v471
    %v811 = vunpack.c.l.b16 %v472
    %v812 = vunpack.c.h.b16 %v472
    %v813 = vunpack.c.l.b16 %v473
    %v814 = vunpack.c.h.b16 %v473
    %v815 = vunpack.c.l.b16 %v474
    %v816 = vunpack.c.l.b16 %v475
    %v817 = vunpack.c.h.b16 %v475
    %v818 = vunpack.c.l.b16 %v476
    %v819 = vunpack.c.h.b16 %v476
    %v820 = vunpack.c.l.b16 %v477
    %v821 = vunpack.c.h.b16 %v477
    %v822 = vunpack.c.l.b16 %v478
    %v823 = vunpack.c.l.b16 %v479
    %v824 = vunpack.c.h.b16 %v479
    %v825 = vunpack.c.l.b16 %v480
    %v826 = vunpack.c.h.b16 %v480
    %v827 = vunpack.c.l.b16 %v481
    %v828 = vunpack.c.h.b16 %v481
    %v829 = vunpack.c.l.b16 %v482
    %v830 = vunpack.c.l.b16 %v483
    %v831 = vunpack.c.h.b16 %v483
    %v832 = vunpack.c.l.b16 %v484
    %v833 = vunpack.c.h.b16 %v484
    %v834 = vunpack.c.l.b16 %v485
    %v835 = vunpack.c.h.b16 %v485
    %v836 = vunpack.c.l.b16 %v486
    %v837 = vunpack.c.l.b16 %v487
    %v838 = vunpack.c.h.b16 %v487
    %v839 = vunpack.c.l.b16 %v488
    %v840 = vunpack.c.h.b16 %v488
    %v841 = vunpack.c.l.b16 %v489
    %v842 = vunpack.c.h.b16 %v489
    %v843 = vunpack.c.l.b16 %v490
    %v844 = vunpack.c.l.b16 %v491
    %v845 = vunpack.c.h.b16 %v491
    %v846 = vunpack.c.l.b16 %v492
    %v847 = vunpack.c.h.b16 %v492
    %v848 = vunpack.c.l.b16 %v493
    %v849 = vunpack.c.h.b16 %v493
    %v850 = vunpack.c.l.b16 %v494
    %v851 = vunpack.c.l.b16 %v495
    %v852 = vunpack.c.h.b16 %v495
    %v853 = vunpack.c.l.b16 %v496
    %v854 = vunpack.c.h.b16 %v496
    %v855 = vunpack.c.l.b16 %v497
    %v856 = vunpack.c.h.b16 %v497
    %v857 = vunpack.c.l.b16 %v498
    %v858 = vunpack.c.l.b16 %v499
    %v859 = vunpack.c.h.b16 %v499
    %v860 = vunpack.c.l.b16 %v500
    %v861 = vunpack.c.h.b16 %v500
    %v862 = vunpack.c.l.b16 %v501
    %v863 = vunpack.c.h.b16 %v501
    %v864 = vunpack.c.l.b16 %v502
    %v865 = vunpack.c.l.b16 %v503
    %v866 = vunpack.c.h.b16 %v503
    %v867 = vunpack.c.l.b16 %v504
    %v868 = vunpack.c.h.b16 %v504
    %v869 = vunpack.c.l.b16 %v505
    %v870 = vunpack.c.h.b16 %v505
    %v871 = vunpack.c.l.b16 %v506
    %v872 = vunpack.c.l.b16 %v507
    %v873 = vunpack.c.h.b16 %v507
    %v874 = vunpack.c.l.b16 %v508
    %v875 = vunpack.c.h.b16 %v508
    %v876 = vunpack.c.l.b16 %v509
    %v877 = vunpack.c.h.b16 %v509
    %v878 = vunpack.c.l.b16 %v510
    %v879 = vpack.c.b16 %v662, %v655
    %v880 = vpack.c.b16 %v663, %v656
    %v881 = vpack.c.b16 %v664, %v657
    %v882 = vpack.c.b16 %v665, %v658
    %v883 = vpack.c.b16 %v666, %v659
    %v884 = vpack.c.b16 %v667, %v660
    %v885 = vpack.c.b16 %v668, %v661
    %v886 = vpack.c.b16 %v676, %v669
    %v887 = vpack.c.b16 %v677, %v670
    %v888 = vpack.c.b16 %v678, %v671
    %v889 = vpack.c.b16 %v679, %v672
    %v890 = vpack.c.b16 %v680, %v673
    %v891 = vpack.c.b16 %v681, %v674
    %v892 = vpack.c.b16 %v682, %v675
    %v893 = vpack.c.b16 %v690, %v683
    %v894 = vpack.c.b16 %v691, %v684
    %v895 = vpack.c.b16 %v692, %v685
    %v896 = vpack.c.b16 %v693, %v686
    %v897 = vpack.c.b16 %v694, %v687
    %v898 = vpack.c.b16 %v695, %v688
    %v899 = vpack.c.b16 %v696, %v689
    %v900 = vpack.c.b16 %v704, %v697
    %v901 = vpack.c.b16 %v705, %v698
    %v902 = vpack.c.b16 %v706, %v699
    %v903 = vpack.c.b16 %v707, %v700
    %v904 = vpack.c.b16 %v708, %v701
    %v905 = vpack.c.b16 %v709, %v702
    %v906 = vpack.c.b16 %v710, %v703
    %v907 = vpack.c.b16 %v718, %v711
    %v908 = vpack.c.b16 %v719, %v712
    %v909 = vpack.c.b16 %v720, %v713
    %v910 = vpack.c.b16 %v721, %v714
    %v911 = vpack.c.b16 %v722, %v715
    %v912 = vpack.c.b16 %v723, %v716
    %v913 = vpack.c.b16 %v724, %v717
    %v914 = vpack.c.b16 %v732, %v725
    %v915 = vpack.c.b16 %v733, %v726
    %v916 = vpack.c.b16 %v734, %v727
    %v917 = vpack.c.b16 %v735, %v728
    %v918 = vpack.c.b16 %v736, %v729
    %v919 = vpack.c.b16 %v737, %v730
    %v920 = vpack.c.b16 %v738, %v731
    %v921 = vpack.c.b16 %v746, %v739
    %v922 = vpack.c.b16 %v747, %v740
    %v923 = vpack.c.b16 %v748, %v741
    %v924 = vpack.c.b16 %v749, %v742
    %v925 = vpack.c.b16 %v750, %v743
    %v926 = vpack.c.b16 %v751, %v744
    %v927 = vpack.c.b16 %v752, %v745
    %v928 = vpack.c.b16 %v760, %v753
    %v929 = vpack.c.b16 %v761, %v754
    %v930 = vpack.c.b16 %v762, %v755
    %v931 = vpack.c.b16 %v763, %v756
    %v932 = vpack.c.b16 %v764, %v757
    %v933 = vpack.c.b16 %v765, %v758
    %v934 = vpack.c.b16 %v766, %v759
    %v935 = vpack.c.b16 %v774, %v767
    %v936 = vpack.c.b16 %v775, %v768
    %v937 = vpack.c.b16 %v776, %v769
    %v938 = vpack.c.b16 %v777, %v770
    %v939 = vpack.c.b16 %v778, %v771
    %v940 = vpack.c.b16 %v779, %v772
    %v941 = vpack.c.b16 %v780, %v773
    %v942 = vpack.c.b16 %v788, %v781
    %v943 = vpack.c.b16 %v789, %v782
    %v944 = vpack.c.b16 %v790, %v783
    %v945 = vpack.c.b16 %v791, %v784
    %v946 = vpack.c.b16 %v792, %v785
    %v947 = vpack.c.b16 %v793, %v786
    %v948 = vpack.c.b16 %v794, %v787
    %v949 = vpack.c.b16 %v802, %v795
    %v950 = vpack.c.b16 %v803, %v796
    %v951 = vpack.c.b16 %v804, %v797
    %v952 = vpack.c.b16 %v805, %v798
    %v953 = vpack.c.b16 %v806, %v799
    %v954 = vpack.c.b16 %v807, %v800
    %v955 = vpack.c.b16 %v808, %v801
    %v956 = vpack.c.b16 %v816, %v809
    %v957 = vpack.c.b16 %v817, %v810
    %v958 = vpack.c.b16 %v818, %v811
    %v959 = vpack.c.b16 %v819, %v812
    %v960 = vpack.c.b16 %v820, %v813
    %v961 = vpack.c.b16 %v821, %v814
    %v962 = vpack.c.b16 %v822, %v815
    %v963 = vpack.c.b16 %v830, %v823
    %v964 = vpack.c.b16 %v831, %v824
    %v965 = vpack.c.b16 %v832, %v825
    %v966 = vpack.c.b16 %v833, %v826
    %v967 = vpack.c.b16 %v834, %v827
    %v968 = vpack.c.b16 %v835, %v828
    %v969 = vpack.c.b16 %v836, %v829
    %v970 = vpack.c.b16 %v844, %v837
    %v971 = vpack.c.b16 %v845, %v838
    %v972 = vpack.c.b16 %v846, %v839
    %v973 = vpack.c.b16 %v847, %v840
    %v974 = vpack.c.b16 %v848, %v841
    %v975 = vpack.c.b16 %v849, %v842
    %v976 = vpack.c.b16 %v850, %v843
    %v977 = vpack.c.b16 %v858, %v851
    %v978 = vpack.c.b16 %v859, %v852
    %v979 = vpack.c.b16 %v860, %v853
    %v980 = vpack.c.b16 %v861, %v854
    %v981 = vpack.c.b16 %v862, %v855
    %v982 = vpack.c.b16 %v863, %v856
    %v983 = vpack.c.b16 %v864, %v857
    %v984 = vpack.c.b16 %v872, %v865
    %v985 = vpack.c.b16 %v873, %v866
    %v986 = vpack.c.b16 %v874, %v867
    %v987 = vpack.c.b16 %v875, %v868
    %v988 = vpack.c.b16 %v876, %v869
    %v989 = vpack.c.b16 %v877, %v870
    %v990 = vpack.c.b16 %v878, %v871
    %1103 = vmatpush.bf16.msra.mxu0 %v928
    %1104 = vmatpush.bf16.msra.mxu0 %v921
    %1105 = vmatpush.bf16.msra.mxu0 %v914
    %1106 = vmatpush.bf16.msra.mxu0 %v907
    %1107 = vmatpush.bf16.msra.mxu0 %v900
    %1108 = vmatpush.bf16.msra.mxu0 %v893
    %1109 = vmatpush.bf16.msra.mxu0 %v886
    %1110 = vmatpush.bf16.msra.mxu0 %v879
    %1111 = vmatmul.bf16.gmra.mxu0 %v381
    %v1112 = vpop.f32.mrf.mxu0
    %v1113 = vadd.f32 %v513, %v1112
    %v1114 = vpop.f32.mrf.mxu0
    %v1115 = vadd.f32 %v513, %v1114
    %1116 = vdwg.mxu0
    %1117 = vmatpush.bf16.msra.mxu0 %v984
    %1118 = vmatpush.bf16.msra.mxu0 %v977
    %1119 = vmatpush.bf16.msra.mxu0 %v970
    %1120 = vmatpush.bf16.msra.mxu0 %v963
    %1121 = vmatpush.bf16.msra.mxu0 %v956
    %1122 = vmatpush.bf16.msra.mxu0 %v949
    %1123 = vmatpush.bf16.msra.mxu0 %v942
    %1124 = vmatpush.bf16.msra.mxu0 %v935
    %1125 = vmatmul.bf16.gmra.mxu0 %v382
    %v1126 = vpop.f32.mrf.mxu0
    %v1127 = vadd.f32 %v1113, %v1126
    %v1128 = vpop.f32.mrf.mxu0
    %v1129 = vadd.f32 %v1115, %v1128
    %1130 = vdwg.mxu0
    %1131 = vmatpush.bf16.msra.mxu0 %v929
    %1132 = vmatpush.bf16.msra.mxu0 %v922
    %1133 = vmatpush.bf16.msra.mxu0 %v915
    %1134 = vmatpush.bf16.msra.mxu0 %v908
    %1135 = vmatpush.bf16.msra.mxu0 %v901
    %1136 = vmatpush.bf16.msra.mxu0 %v894
    %1137 = vmatpush.bf16.msra.mxu0 %v887
    %1138 = vmatpush.bf16.msra.mxu0 %v880
    %1139 = vmatmul.bf16.gmra.mxu0 %v381
    %v1140 = vpop.f32.mrf.mxu0
    %v1141 = vadd.f32 %v514, %v1140
    %v1142 = vpop.f32.mrf.mxu0
    %v1143 = vadd.f32 %v514, %v1142
    %1144 = vdwg.mxu0
    %1145 = vmatpush.bf16.msra.mxu0 %v985
    %1146 = vmatpush.bf16.msra.mxu0 %v978
    %1147 = vmatpush.bf16.msra.mxu0 %v971
    %1148 = vmatpush.bf16.msra.mxu0 %v964
    %1149 = vmatpush.bf16.msra.mxu0 %v957
    %1150 = vmatpush.bf16.msra.mxu0 %v950
    %1151 = vmatpush.bf16.msra.mxu0 %v943
    %1152 = vmatpush.bf16.msra.mxu0 %v936
    %1153 = vmatmul.bf16.gmra.mxu0 %v382
    %v1154 = vpop.f32.mrf.mxu0
    %v1155 = vadd.f32 %v1141, %v1154
    %v1156 = vpop.f32.mrf.mxu0
    %v1157 = vadd.f32 %v1143, %v1156
    %1158 = vdwg.mxu0
    %1159 = vmatpush.bf16.msra.mxu0 %v930
    %1160 = vmatpush.bf16.msra.mxu0 %v923
    %1161 = vmatpush.bf16.msra.mxu0 %v916
    %1162 = vmatpush.bf16.msra.mxu0 %v909
    %1163 = vmatpush.bf16.msra.mxu0 %v902
    %1164 = vmatpush.bf16.msra.mxu0 %v895
    %1165 = vmatpush.bf16.msra.mxu0 %v888
    %1166 = vmatpush.bf16.msra.mxu0 %v881
    %1167 = vmatmul.bf16.gmra.mxu0 %v381
    %v1168 = vpop.f32.mrf.mxu0
    %v1169 = vadd.f32 %v515, %v1168
    %v1170 = vpop.f32.mrf.mxu0
    %v1171 = vadd.f32 %v515, %v1170
    %1172 = vdwg.mxu0
    %1173 = vmatpush.bf16.msra.mxu0 %v986
    %1174 = vmatpush.bf16.msra.mxu0 %v979
    %1175 = vmatpush.bf16.msra.mxu0 %v972
    %1176 = vmatpush.bf16.msra.mxu0 %v965
    %1177 = vmatpush.bf16.msra.mxu0 %v958
    %1178 = vmatpush.bf16.msra.mxu0 %v951
    %1179 = vmatpush.bf16.msra.mxu0 %v944
    %1180 = vmatpush.bf16.msra.mxu0 %v937
    %1181 = vmatmul.bf16.gmra.mxu0 %v382
    %v1182 = vpop.f32.mrf.mxu0
    %v1183 = vadd.f32 %v1169, %v1182
    %v1184 = vpop.f32.mrf.mxu0
    %v1185 = vadd.f32 %v1171, %v1184
    %1186 = vdwg.mxu0
    %1187 = vmatpush.bf16.msra.mxu0 %v931
    %1188 = vmatpush.bf16.msra.mxu0 %v924
    %1189 = vmatpush.bf16.msra.mxu0 %v917
    %1190 = vmatpush.bf16.msra.mxu0 %v910
    %1191 = vmatpush.bf16.msra.mxu0 %v903
    %1192 = vmatpush.bf16.msra.mxu0 %v896
    %1193 = vmatpush.bf16.msra.mxu0 %v889
    %1194 = vmatpush.bf16.msra.mxu0 %v882
    %1195 = vmatmul.bf16.gmra.mxu0 %v381
    %v1196 = vpop.f32.mrf.mxu0
    %v1197 = vadd.f32 %v516, %v1196
    %v1198 = vpop.f32.mrf.mxu0
    %v1199 = vadd.f32 %v516, %v1198
    %1200 = vdwg.mxu0
    %1201 = vmatpush.bf16.msra.mxu0 %v987
    %1202 = vmatpush.bf16.msra.mxu0 %v980
    %1203 = vmatpush.bf16.msra.mxu0 %v973
    %1204 = vmatpush.bf16.msra.mxu0 %v966
    %1205 = vmatpush.bf16.msra.mxu0 %v959
    %1206 = vmatpush.bf16.msra.mxu0 %v952
    %1207 = vmatpush.bf16.msra.mxu0 %v945
    %1208 = vmatpush.bf16.msra.mxu0 %v938
    %1209 = vmatmul.bf16.gmra.mxu0 %v382
    %v1210 = vpop.f32.mrf.mxu0
    %v1211 = vadd.f32 %v1197, %v1210
    %v1212 = vpop.f32.mrf.mxu0
    %v1213 = vadd.f32 %v1199, %v1212
    %1214 = vdwg.mxu0
    %1215 = vmatpush.bf16.msra.mxu0 %v932
    %1216 = vmatpush.bf16.msra.mxu0 %v925
    %1217 = vmatpush.bf16.msra.mxu0 %v918
    %1218 = vmatpush.bf16.msra.mxu0 %v911
    %1219 = vmatpush.bf16.msra.mxu0 %v904
    %1220 = vmatpush.bf16.msra.mxu0 %v897
    %1221 = vmatpush.bf16.msra.mxu0 %v890
    %1222 = vmatpush.bf16.msra.mxu0 %v883
    %1223 = vmatmul.bf16.gmra.mxu0 %v381
    %v1224 = vpop.f32.mrf.mxu0
    %v1225 = vadd.f32 %v517, %v1224
    %v1226 = vpop.f32.mrf.mxu0
    %v1227 = vadd.f32 %v517, %v1226
    %1228 = vdwg.mxu0
    %1229 = vmatpush.bf16.msra.mxu0 %v988
    %1230 = vmatpush.bf16.msra.mxu0 %v981
    %1231 = vmatpush.bf16.msra.mxu0 %v974
    %1232 = vmatpush.bf16.msra.mxu0 %v967
    %1233 = vmatpush.bf16.msra.mxu0 %v960
    %1234 = vmatpush.bf16.msra.mxu0 %v953
    %1235 = vmatpush.bf16.msra.mxu0 %v946
    %1236 = vmatpush.bf16.msra.mxu0 %v939
    %1237 = vmatmul.bf16.gmra.mxu0 %v382
    %v1238 = vpop.f32.mrf.mxu0
    %v1239 = vadd.f32 %v1225, %v1238
    %v1240 = vpop.f32.mrf.mxu0
    %v1241 = vadd.f32 %v1227, %v1240
    %1242 = vdwg.mxu0
    %1243 = vmatpush.bf16.msra.mxu0 %v933
    %1244 = vmatpush.bf16.msra.mxu0 %v926
    %1245 = vmatpush.bf16.msra.mxu0 %v919
    %1246 = vmatpush.bf16.msra.mxu0 %v912
    %1247 = vmatpush.bf16.msra.mxu0 %v905
    %1248 = vmatpush.bf16.msra.mxu0 %v898
    %1249 = vmatpush.bf16.msra.mxu0 %v891
    %1250 = vmatpush.bf16.msra.mxu0 %v884
    %1251 = vmatmul.bf16.gmra.mxu0 %v381
    %v1252 = vpop.f32.mrf.mxu0
    %v1253 = vadd.f32 %v518, %v1252
    %v1254 = vpop.f32.mrf.mxu0
    %v1255 = vadd.f32 %v518, %v1254
    %1256 = vdwg.mxu0
    %1257 = vmatpush.bf16.msra.mxu0 %v989
    %1258 = vmatpush.bf16.msra.mxu0 %v982
    %1259 = vmatpush.bf16.msra.mxu0 %v975
    %1260 = vmatpush.bf16.msra.mxu0 %v968
    %1261 = vmatpush.bf16.msra.mxu0 %v961
    %1262 = vmatpush.bf16.msra.mxu0 %v954
    %1263 = vmatpush.bf16.msra.mxu0 %v947
    %1264 = vmatpush.bf16.msra.mxu0 %v940
    %1265 = vmatmul.bf16.gmra.mxu0 %v382
    %v1266 = vpop.f32.mrf.mxu0
    %v1267 = vadd.f32 %v1253, %v1266
    %v1268 = vpop.f32.mrf.mxu0
    %v1269 = vadd.f32 %v1255, %v1268
    %1270 = vdwg.mxu0
    %1271 = vmatpush.bf16.msra.mxu0 %v934
    %1272 = vmatpush.bf16.msra.mxu0 %v927
    %1273 = vmatpush.bf16.msra.mxu0 %v920
    %1274 = vmatpush.bf16.msra.mxu0 %v913
    %1275 = vmatpush.bf16.msra.mxu0 %v906
    %1276 = vmatpush.bf16.msra.mxu0 %v899
    %1277 = vmatpush.bf16.msra.mxu0 %v892
    %1278 = vmatpush.bf16.msra.mxu0 %v885
    %1279 = vmatmul.bf16.gmra.mxu0 %v381
    %v1280 = vpop.f32.mrf.mxu0
    %v1281 = vadd.f32 %v519, %v1280
    %v1282 = vpop.f32.mrf.mxu0
    %v1283 = vadd.f32 %v519, %v1282
    %1284 = vdwg.mxu0
    %1285 = vmatpush.bf16.msra.mxu0 %v990
    %1286 = vmatpush.bf16.msra.mxu0 %v983
    %1287 = vmatpush.bf16.msra.mxu0 %v976
    %1288 = vmatpush.bf16.msra.mxu0 %v969
    %1289 = vmatpush.bf16.msra.mxu0 %v962
    %1290 = vmatpush.bf16.msra.mxu0 %v955
    %1291 = vmatpush.bf16.msra.mxu0 %v948
    %1292 = vmatpush.bf16.msra.mxu0 %v941
    %1293 = vmatmul.bf16.gmra.mxu0 %v382
    %v1294 = vpop.f32.mrf.mxu0
    %v1295 = vadd.f32 %v1281, %v1294
    %v1296 = vpop.f32.mrf.mxu0
    %v1297 = vadd.f32 %v1283, %v1296
    %1298 = vdwg.mxu0
    %v1299 = vtanh.pop %v1127
    %v1300 = vtanh.pop %v1155
    %v1301 = vtanh.pop %v1183
    %v1302 = vtanh.pop %v1211
    %v1303 = vtanh.pop %v1239
    %v1304 = vtanh.pop %v1267
    %v1305 = vtanh.pop %v1295
    %v1306 = vtanh.pop %v1129
    %v1307 = vtanh.pop %v1157
    %v1308 = vtanh.pop %v1185
    %v1309 = vtanh.pop %v1213
    %v1310 = vtanh.pop %v1241
    %v1311 = vtanh.pop %v1269
    %v1312 = vtanh.pop %v1297
    %1313 = vst [vmem:[#allocation2] sm:$0xff] %v1299
    %1314 = vst [vmem:[#allocation2 + $0x8] sm:$0xff] %v1300
    %1315 = vst [vmem:[#allocation2 + $0x10] sm:$0xff] %v1301
    %1316 = vst [vmem:[#allocation2 + $0x18] sm:$0xff] %v1302
    %1317 = vst [vmem:[#allocation2 + $0x20] sm:$0xff] %v1303
    %1318 = vst [vmem:[#allocation2 + $0x28] sm:$0xff] %v1304
    %vm1319 = vcmask 130048
    %1320 = vst.msk [vmem:[#allocation2 + $0x30] sm:$0xff] %vm1319, %v1305
    %1321 = vst [vmem:[#allocation2 + $0x38] sm:$0xff] %v1306
    %1322 = vst [vmem:[#allocation2 + $0x40] sm:$0xff] %v1307
    %1323 = vst [vmem:[#allocation2 + $0x48] sm:$0xff] %v1308
    %1324 = vst [vmem:[#allocation2 + $0x50] sm:$0xff] %v1309
    %1325 = vst [vmem:[#allocation2 + $0x58] sm:$0xff] %v1310
    %1326 = vst [vmem:[#allocation2 + $0x60] sm:$0xff] %v1311
    %1327 = vst.msk [vmem:[#allocation2 + $0x68] sm:$0xff] %vm1319, %v1312
    // Predicated region
    $region30: #{tpu_custom_call.1} parent=1 // pred_check
      _
    $region31: #{tpu_custom_call.1} parent=1 // pred_check_branch
      %1329 = sbr.rel (0) target = $region33
    $region32: #{tpu_custom_call.1} parent=1 // pred_region
      %1331 = vsyncadd [#allocation3], 0
      %s1332 = sshll.u32 [#allocation2], 4
      %s1333 = int_to_ptr.vmem [resolvable:$true] %s1332
      %s1334 = sshll.u32 %s7, 4
      %s1335 = int_to_ptr.hbm [resolvable:$true] %s1334
      %1340 = dma.vmem_to_hbm [thread:$0]  %s1333, 1792, %s1335, [#allocation3], 896, 896, 56
    $region33: #{tpu_custom_call.1} parent=1 // pred_fallthru
      _
    // Predicated region
    $region34: #{tpu_custom_call.1} parent=1 // pred_check
      _
    $region35: #{tpu_custom_call.1} parent=1 // pred_check_branch
      %1342 = sbr.rel (0) target = $region37
    $region36: #{tpu_custom_call.1} parent=1 // pred_region
      %1344 = dma.done [#allocation3], 1792
    $region37: #{tpu_custom_call.1} parent=1 // pred_fallthru
      _
    %1345 = vsyncpa [#allocation3], 1

</llo_original>
